<compile_context>
chip_gen: v6e
topology: v6e:2x2x1
jax: 0.10.0
libtpu: 0.0.40
codegen_flags: <defaults>
</compile_context>

<pallas_src>
import functools

import jax
import jax.numpy as jnp
from jax.experimental import pallas as pl
from jax.experimental.pallas import tpu as pltpu


def _conv2d_im2col_kernel(x_ref, w_ref, b_ref, o_ref, *, kh, kw, img_w, hw):
    """Whole batch in one invocation (no grid).

    x_ref: (N, Cin, H*W)          NCHW activations, spatial flattened to lanes
    w_ref: (Cout_pad, KH*KW*Cin)  weights, tap-major ((dh,dw) outer, cin inner)
    b_ref: (Cout_pad, 1)          bias (rows >= Cout are zero)
    o_ref: (N, Cout_pad, H*W)     lane-dense output (valid region cut by wrapper)
    """
    n = x_ref.shape[0]
    for b in range(n):                      # tiny static batch -> fully unrolled
        xb = x_ref[b]                       # (Cin, H*W)
        pieces = []
        for k in range(kh * kw):
            dh, dw = divmod(k, kw)
            t = dh * img_w + dw             # flat-index lane shift of this tap
            if t == 0:
                pieces.append(xb)
            else:
                # Wrap-around lane rotate built from two lane slices; wrapped
                # lanes only reach border outputs the wrapper slices away.
                pieces.append(jnp.concatenate([xb[:, t:], xb[:, :t]], axis=1))
        # im2col operand lives in registers; rows ordered (tap outer, cin inner).
        col = jnp.concatenate(pieces, axis=0)           # (KH*KW*Cin, H*W)
        # One full-contraction MXU matmul per image, f32 accumulate.
        y = jnp.dot(w_ref[...], col, preferred_element_type=jnp.float32)
        # Bias added exactly once; lane-dense (8 x 256) store.
        o_ref[b] = (y + b_ref[...]).astype(o_ref.dtype)


def prepare_conv_params(weight_oihw, bias, cout_pad=8):
    """One-time parameter repack (hoisted out of the per-call path)."""
    cout, cin, kh, kw = weight_oihw.shape
    # Rows of the im2col matrix are (dh, dw) outer, cin inner.
    w_col = jnp.transpose(weight_oihw, (0, 2, 3, 1)).reshape(cout, kh * kw * cin)
    w_col = jnp.pad(w_col, ((0, cout_pad - cout), (0, 0)))
    b_col = jnp.pad(bias.reshape(cout, 1), ((0, cout_pad - cout), (0, 0)))
    return w_col, b_col


def conv2d_net_forward(x_nchw, w_col, b_col, *, kh, kw, cout):
    """Equivalent of Net.forward: y = Conv2d(3, 6, 3, padding=0, stride=1)(x)."""
    n, cin, h, w = x_nchw.shape
    cout_pad = w_col.shape[0]
    ho, wo = h - kh + 1, w - kw + 1
    hw = h * w

    # Contiguous, layout-only reshape (no transpose, no pad).
    x_flat = x_nchw.reshape(n, cin, hw)

    kernel = functools.partial(_conv2d_im2col_kernel, kh=kh, kw=kw, img_w=w, hw=hw)

    itemsize = jnp.dtype(x_nchw.dtype).itemsize
    cost = pl.CostEstimate(
        flops=2 * n * cout_pad * (kh * kw * cin) * hw,
        transcendentals=0,
        bytes_accessed=(x_flat.size + w_col.size + b_col.size + n * cout_pad * hw)
        * itemsize,
    )

    y = pl.pallas_call(
        kernel,
        out_shape=jax.ShapeDtypeStruct((n, cout_pad, hw), x_nchw.dtype),
        in_specs=[
            pl.BlockSpec(memory_space=pltpu.MemorySpace.VMEM),
            pl.BlockSpec(memory_space=pltpu.MemorySpace.VMEM),
            pl.BlockSpec(memory_space=pltpu.MemorySpace.VMEM),
        ],
        out_specs=pl.BlockSpec(memory_space=pltpu.MemorySpace.VMEM),
        cost_estimate=cost,
    )(x_flat, w_col, b_col)

    # Rows are already NCHW-ordered; drop padded channels and border lanes.
    return y.reshape(n, cout_pad, h, w)[:, :cout, :ho, :wo]


if __name__ == "__main__":
    key = jax.random.PRNGKey(0)
    kx, kw_, kb = jax.random.split(key, 3)

    # Small shapes consistent with Conv2d(3 -> 6, k=3): x is (N, C, H, W).
    N, Cin, H, W = 2, 3, 16, 16
    Cout, KH, KW = 6, 3, 3

    x = jax.random.normal(kx, (N, Cin, H, W), dtype=jnp.float32)

    # Deterministic parameter init (mirrors torch Conv2d's U(-1/sqrt(fan_in), +)).
    fan_in = Cin * KH * KW
    bound = 1.0 / (fan_in ** 0.5)
    weight = jax.random.uniform(kw_, (Cout, Cin, KH, KW), jnp.float32, -bound, bound)
    bias = jax.random.uniform(kb, (Cout,), jnp.float32, -bound, bound)

    # One-time parameter repacking (out of the per-call path).
    w_col, b_col = prepare_conv_params(weight, bias, cout_pad=8)

    conv_fn = jax.jit(functools.partial(conv2d_net_forward, kh=KH, kw=KW, cout=Cout))
    out = conv_fn(x, w_col, b_col)
    out = jax.block_until_ready(out)

    # Silent correctness check against XLA's reference conv.
    ref = jax.lax.conv_general_dilated(
        x, weight, window_strides=(1, 1), padding="VALID",
        dimension_numbers=("NCHW", "OIHW", "NCHW"),
    ) + bias.reshape(1, Cout, 1, 1)

    assert out.shape == (N, Cout, H - KH + 1, W - KW + 1), out.shape
    assert out.dtype == jnp.float32
    assert jnp.allclose(out, ref, atol=1e-4, rtol=1e-4)

    print("KERNEL_OK")
</pallas_src>

<mosaic_0001>
module attributes {stable_mosaic.version = 11 : i64} {
  func.func @_conv2d_im2col_kernel(%arg0: memref<2x3x256xf32, #tpu.memory_space<vmem>>, %arg1: memref<8x27xf32, #tpu.memory_space<vmem>>, %arg2: memref<8x1xf32, #tpu.memory_space<vmem>>, %arg3: memref<2x8x256xf32, #tpu.memory_space<vmem>>) attributes {dimension_semantics = [], scalar_prefetch = 0 : i64, scratch_operands = 0 : i64, tpu.core_type = #tpu.core_type<tc>} {
    %c0 = arith.constant 0 : index
    %c0_0 = arith.constant 0 : index
    %c0_1 = arith.constant 0 : index
    %0 = vector.load %arg0[%c0, %c0_0, %c0_1] : memref<2x3x256xf32, #tpu.memory_space<vmem>>, vector<1x3x256xf32>
    %1 = vector.shape_cast %0 : vector<1x3x256xf32> to vector<3x256xf32>
    %2 = vector.extract_strided_slice %1 {offsets = [0, 1], sizes = [3, 255], strides = [1, 1]} : vector<3x256xf32> to vector<3x255xf32>
    %3 = vector.extract_strided_slice %1 {offsets = [0, 0], sizes = [3, 1], strides = [1, 1]} : vector<3x256xf32> to vector<3x1xf32>
    %4 = tpu.concatenate %2, %3 in 1 : vector<3x255xf32>, vector<3x1xf32> -> vector<3x256xf32>
    %5 = vector.extract_strided_slice %1 {offsets = [0, 2], sizes = [3, 254], strides = [1, 1]} : vector<3x256xf32> to vector<3x254xf32>
    %6 = vector.extract_strided_slice %1 {offsets = [0, 0], sizes = [3, 2], strides = [1, 1]} : vector<3x256xf32> to vector<3x2xf32>
    %7 = tpu.concatenate %5, %6 in 1 : vector<3x254xf32>, vector<3x2xf32> -> vector<3x256xf32>
    %8 = vector.extract_strided_slice %1 {offsets = [0, 16], sizes = [3, 240], strides = [1, 1]} : vector<3x256xf32> to vector<3x240xf32>
    %9 = vector.extract_strided_slice %1 {offsets = [0, 0], sizes = [3, 16], strides = [1, 1]} : vector<3x256xf32> to vector<3x16xf32>
    %10 = tpu.concatenate %8, %9 in 1 : vector<3x240xf32>, vector<3x16xf32> -> vector<3x256xf32>
    %11 = vector.extract_strided_slice %1 {offsets = [0, 17], sizes = [3, 239], strides = [1, 1]} : vector<3x256xf32> to vector<3x239xf32>
    %12 = vector.extract_strided_slice %1 {offsets = [0, 0], sizes = [3, 17], strides = [1, 1]} : vector<3x256xf32> to vector<3x17xf32>
    %13 = tpu.concatenate %11, %12 in 1 : vector<3x239xf32>, vector<3x17xf32> -> vector<3x256xf32>
    %14 = vector.extract_strided_slice %1 {offsets = [0, 18], sizes = [3, 238], strides = [1, 1]} : vector<3x256xf32> to vector<3x238xf32>
    %15 = vector.extract_strided_slice %1 {offsets = [0, 0], sizes = [3, 18], strides = [1, 1]} : vector<3x256xf32> to vector<3x18xf32>
    %16 = tpu.concatenate %14, %15 in 1 : vector<3x238xf32>, vector<3x18xf32> -> vector<3x256xf32>
    %17 = vector.extract_strided_slice %1 {offsets = [0, 32], sizes = [3, 224], strides = [1, 1]} : vector<3x256xf32> to vector<3x224xf32>
    %18 = vector.extract_strided_slice %1 {offsets = [0, 0], sizes = [3, 32], strides = [1, 1]} : vector<3x256xf32> to vector<3x32xf32>
    %19 = tpu.concatenate %17, %18 in 1 : vector<3x224xf32>, vector<3x32xf32> -> vector<3x256xf32>
    %20 = vector.extract_strided_slice %1 {offsets = [0, 33], sizes = [3, 223], strides = [1, 1]} : vector<3x256xf32> to vector<3x223xf32>
    %21 = vector.extract_strided_slice %1 {offsets = [0, 0], sizes = [3, 33], strides = [1, 1]} : vector<3x256xf32> to vector<3x33xf32>
    %22 = tpu.concatenate %20, %21 in 1 : vector<3x223xf32>, vector<3x33xf32> -> vector<3x256xf32>
    %23 = vector.extract_strided_slice %1 {offsets = [0, 34], sizes = [3, 222], strides = [1, 1]} : vector<3x256xf32> to vector<3x222xf32>
    %24 = vector.extract_strided_slice %1 {offsets = [0, 0], sizes = [3, 34], strides = [1, 1]} : vector<3x256xf32> to vector<3x34xf32>
    %25 = tpu.concatenate %23, %24 in 1 : vector<3x222xf32>, vector<3x34xf32> -> vector<3x256xf32>
    %26 = tpu.concatenate %1, %4, %7, %10, %13, %16, %19, %22, %25 in 0 : vector<3x256xf32>, vector<3x256xf32>, vector<3x256xf32>, vector<3x256xf32>, vector<3x256xf32>, vector<3x256xf32>, vector<3x256xf32>, vector<3x256xf32>, vector<3x256xf32> -> vector<27x256xf32>
    %c0_2 = arith.constant 0 : index
    %c0_3 = arith.constant 0 : index
    %27 = vector.load %arg1[%c0_2, %c0_3] : memref<8x27xf32, #tpu.memory_space<vmem>>, vector<8x27xf32>
    %cst = arith.constant dense<0.000000e+00> : vector<8x256xf32>
    %28 = tpu.matmul %27, %26, %cst {dimension_numbers = #tpu.dot_dimension_numbers<[1], [0], [0], [1], [0, 0, 1, 1], [], []>} : vector<8x27xf32>, vector<27x256xf32>, vector<8x256xf32> -> vector<8x256xf32>
    %c0_4 = arith.constant 0 : index
    %c0_5 = arith.constant 0 : index
    %29 = vector.load %arg2[%c0_4, %c0_5] : memref<8x1xf32, #tpu.memory_space<vmem>>, vector<8x1xf32>
    %30 = vector.broadcast %29 : vector<8x1xf32> to vector<8x256xf32>
    %31 = arith.addf %28, %30 : vector<8x256xf32>
    %c0_6 = arith.constant 0 : index
    %c0_7 = arith.constant 0 : index
    %c0_8 = arith.constant 0 : index
    %32 = vector.load %arg3[%c0_6, %c0_7, %c0_8] : memref<2x8x256xf32, #tpu.memory_space<vmem>>, vector<1x8x256xf32>
    %33 = vector.shape_cast %32 : vector<1x8x256xf32> to vector<8x256xf32>
    %34 = vector.shape_cast %31 : vector<8x256xf32> to vector<1x8x256xf32>
    tpu.vector_store %arg3[%c0_6, %c0_7, %c0_8], %34 {strides = array<i32>} : memref<2x8x256xf32, #tpu.memory_space<vmem>>, vector<1x8x256xf32>,
    %c1 = arith.constant 1 : index
    %c0_9 = arith.constant 0 : index
    %c0_10 = arith.constant 0 : index
    %35 = vector.load %arg0[%c1, %c0_9, %c0_10] : memref<2x3x256xf32, #tpu.memory_space<vmem>>, vector<1x3x256xf32>
    %36 = vector.shape_cast %35 : vector<1x3x256xf32> to vector<3x256xf32>
    %37 = vector.extract_strided_slice %36 {offsets = [0, 1], sizes = [3, 255], strides = [1, 1]} : vector<3x256xf32> to vector<3x255xf32>
    %38 = vector.extract_strided_slice %36 {offsets = [0, 0], sizes = [3, 1], strides = [1, 1]} : vector<3x256xf32> to vector<3x1xf32>
    %39 = tpu.concatenate %37, %38 in 1 : vector<3x255xf32>, vector<3x1xf32> -> vector<3x256xf32>
    %40 = vector.extract_strided_slice %36 {offsets = [0, 2], sizes = [3, 254], strides = [1, 1]} : vector<3x256xf32> to vector<3x254xf32>
    %41 = vector.extract_strided_slice %36 {offsets = [0, 0], sizes = [3, 2], strides = [1, 1]} : vector<3x256xf32> to vector<3x2xf32>
    %42 = tpu.concatenate %40, %41 in 1 : vector<3x254xf32>, vector<3x2xf32> -> vector<3x256xf32>
    %43 = vector.extract_strided_slice %36 {offsets = [0, 16], sizes = [3, 240], strides = [1, 1]} : vector<3x256xf32> to vector<3x240xf32>
    %44 = vector.extract_strided_slice %36 {offsets = [0, 0], sizes = [3, 16], strides = [1, 1]} : vector<3x256xf32> to vector<3x16xf32>
    %45 = tpu.concatenate %43, %44 in 1 : vector<3x240xf32>, vector<3x16xf32> -> vector<3x256xf32>
    %46 = vector.extract_strided_slice %36 {offsets = [0, 17], sizes = [3, 239], strides = [1, 1]} : vector<3x256xf32> to vector<3x239xf32>
    %47 = vector.extract_strided_slice %36 {offsets = [0, 0], sizes = [3, 17], strides = [1, 1]} : vector<3x256xf32> to vector<3x17xf32>
    %48 = tpu.concatenate %46, %47 in 1 : vector<3x239xf32>, vector<3x17xf32> -> vector<3x256xf32>
    %49 = vector.extract_strided_slice %36 {offsets = [0, 18], sizes = [3, 238], strides = [1, 1]} : vector<3x256xf32> to vector<3x238xf32>
    %50 = vector.extract_strided_slice %36 {offsets = [0, 0], sizes = [3, 18], strides = [1, 1]} : vector<3x256xf32> to vector<3x18xf32>
    %51 = tpu.concatenate %49, %50 in 1 : vector<3x238xf32>, vector<3x18xf32> -> vector<3x256xf32>
    %52 = vector.extract_strided_slice %36 {offsets = [0, 32], sizes = [3, 224], strides = [1, 1]} : vector<3x256xf32> to vector<3x224xf32>
    %53 = vector.extract_strided_slice %36 {offsets = [0, 0], sizes = [3, 32], strides = [1, 1]} : vector<3x256xf32> to vector<3x32xf32>
    %54 = tpu.concatenate %52, %53 in 1 : vector<3x224xf32>, vector<3x32xf32> -> vector<3x256xf32>
    %55 = vector.extract_strided_slice %36 {offsets = [0, 33], sizes = [3, 223], strides = [1, 1]} : vector<3x256xf32> to vector<3x223xf32>
    %56 = vector.extract_strided_slice %36 {offsets = [0, 0], sizes = [3, 33], strides = [1, 1]} : vector<3x256xf32> to vector<3x33xf32>
    %57 = tpu.concatenate %55, %56 in 1 : vector<3x223xf32>, vector<3x33xf32> -> vector<3x256xf32>
    %58 = vector.extract_strided_slice %36 {offsets = [0, 34], sizes = [3, 222], strides = [1, 1]} : vector<3x256xf32> to vector<3x222xf32>
    %59 = vector.extract_strided_slice %36 {offsets = [0, 0], sizes = [3, 34], strides = [1, 1]} : vector<3x256xf32> to vector<3x34xf32>
    %60 = tpu.concatenate %58, %59 in 1 : vector<3x222xf32>, vector<3x34xf32> -> vector<3x256xf32>
    %61 = tpu.concatenate %36, %39, %42, %45, %48, %51, %54, %57, %60 in 0 : vector<3x256xf32>, vector<3x256xf32>, vector<3x256xf32>, vector<3x256xf32>, vector<3x256xf32>, vector<3x256xf32>, vector<3x256xf32>, vector<3x256xf32>, vector<3x256xf32> -> vector<27x256xf32>
    %c0_11 = arith.constant 0 : index
    %c0_12 = arith.constant 0 : index
    %62 = vector.load %arg1[%c0_11, %c0_12] : memref<8x27xf32, #tpu.memory_space<vmem>>, vector<8x27xf32>
    %cst_13 = arith.constant dense<0.000000e+00> : vector<8x256xf32>
    %63 = tpu.matmul %62, %61, %cst_13 {dimension_numbers = #tpu.dot_dimension_numbers<[1], [0], [0], [1], [0, 0, 1, 1], [], []>} : vector<8x27xf32>, vector<27x256xf32>, vector<8x256xf32> -> vector<8x256xf32>
    %c0_14 = arith.constant 0 : index
    %c0_15 = arith.constant 0 : index
    %64 = vector.load %arg2[%c0_14, %c0_15] : memref<8x1xf32, #tpu.memory_space<vmem>>, vector<8x1xf32>
    %65 = vector.broadcast %64 : vector<8x1xf32> to vector<8x256xf32>
    %66 = arith.addf %63, %65 : vector<8x256xf32>
    %c1_16 = arith.constant 1 : index
    %c0_17 = arith.constant 0 : index
    %c0_18 = arith.constant 0 : index
    %67 = vector.load %arg3[%c1_16, %c0_17, %c0_18] : memref<2x8x256xf32, #tpu.memory_space<vmem>>, vector<1x8x256xf32>
    %68 = vector.shape_cast %67 : vector<1x8x256xf32> to vector<8x256xf32>
    %69 = vector.shape_cast %66 : vector<8x256xf32> to vector<1x8x256xf32>
    tpu.vector_store %arg3[%c1_16, %c0_17, %c0_18], %69 {strides = array<i32>} : memref<2x8x256xf32, #tpu.memory_space<vmem>>, vector<1x8x256xf32>,
    return
  }
}

</mosaic_0001>

<llo_original>
// kernel: conv2d_net_forward.1
$region0: #{conv2d_net_forward.1}
  #allocation0 [shape = 'u32[]', space=smem, size = 0x4, offset = 0x4, fixed_abs, tag = 'smem constant byte address 0x4 - core index']
  #allocation1 [shape = 'u32[144,128]{1,0:T(1,128)}', space=vmem, size = 0x12000, scoped, tag = 'internal scratch']
  %s0 = inlined_call_operand.vmem [shape: f32[2,3,256], index: 0, kind: input, shape index: {}]
  %s1 = inlined_call_operand.vmem [shape: f32[8,27], index: 1, kind: input, shape index: {}]
  %s2 = inlined_call_operand.vmem [shape: f32[8,1], index: 2, kind: input, shape index: {}]
  %s3 = inlined_call_operand.vmem [shape: f32[2,8,256], index: 3, kind: output, shape index: {}]
  %s4 = sld [smem:[#allocation0]]
  $region22: #{conv2d_net_forward.1} parent=0
    _
  %s6 = ssub.s32 1, %s4
  %s7 = scalar_select 0, %s6, %s4
  // Predicated region
  $region2: #{conv2d_net_forward.1} parent=0 // pred_check
    _
  $region3: #{conv2d_net_forward.1} parent=0 // pred_check_branch
    %9 = sbr.rel (0) target = $region5
  $region4: #{conv2d_net_forward.1} parent=0 // pred_region
    _
  $region5: #{conv2d_net_forward.1} parent=0 // pred_fallthru
    _
  // Predicated region
  $region6: #{conv2d_net_forward.1} parent=0 // pred_check
    _
  $region7: #{conv2d_net_forward.1} parent=0 // pred_check_branch
    %11 = sbr.rel (0) target = $region9
  $region8: #{conv2d_net_forward.1} parent=0 // pred_region
    _
  $region9: #{conv2d_net_forward.1} parent=0 // pred_fallthru
    _
  // Predicated region
  $region10: #{conv2d_net_forward.1} parent=0 // pred_check
    _
  $region11: #{conv2d_net_forward.1} parent=0 // pred_check_branch
    %13 = sbr.rel (0) target = $region13
  $region12: #{conv2d_net_forward.1} parent=0 // pred_region
    _
  $region13: #{conv2d_net_forward.1} parent=0 // pred_fallthru
    _
  %v14 = vld [vmem:[%s0] sm:$0x77]
  %v16 = vcombine.high %v14, %v14
  %17 = vrot.lane.b32.xlu0 %v14, 127
  %v18 = vpop.permute.xlu0 %17
  %19 = vrot.lane.b32.xlu0 %v16, 127
  %v20 = vpop.permute.xlu0 %19
  %vm21 = vcmask 1039360
  %v22 = vsel %vm21, %v18, %v20
  %v25 = vsel %vm21, %v20, %v18
  %26 = vrot.lane.b32.xlu0 %v14, 126
  %v27 = vpop.permute.xlu0 %26
  %28 = vrot.lane.b32.xlu0 %v16, 126
  %v29 = vpop.permute.xlu0 %28
  %vm30 = vcmask 1031168
  %v31 = vsel %vm30, %v27, %v29
  %v34 = vsel %vm30, %v29, %v27
  %35 = vrot.lane.b32.xlu0 %v14, 112
  %v36 = vpop.permute.xlu0 %35
  %37 = vrot.lane.b32.xlu0 %v16, 112
  %v38 = vpop.permute.xlu0 %37
  %vm39 = vcmask 916480
  %v40 = vsel %vm39, %v36, %v38
  %v43 = vsel %vm39, %v38, %v36
  %44 = vrot.lane.b32.xlu0 %v14, 111
  %v45 = vpop.permute.xlu0 %44
  %46 = vrot.lane.b32.xlu0 %v16, 111
  %v47 = vpop.permute.xlu0 %46
  %vm48 = vcmask 908288
  %v49 = vsel %vm48, %v45, %v47
  %v52 = vsel %vm48, %v47, %v45
  %53 = vrot.lane.b32.xlu0 %v14, 110
  %v54 = vpop.permute.xlu0 %53
  %55 = vrot.lane.b32.xlu0 %v16, 110
  %v56 = vpop.permute.xlu0 %55
  %vm57 = vcmask 900096
  %v58 = vsel %vm57, %v54, %v56
  %v61 = vsel %vm57, %v56, %v54
  %62 = vrot.lane.b32.xlu0 %v14, 96
  %v63 = vpop.permute.xlu0 %62
  %64 = vrot.lane.b32.xlu0 %v16, 96
  %v65 = vpop.permute.xlu0 %64
  %vm66 = vcmask 785408
  %v67 = vsel %vm66, %v63, %v65
  %v70 = vsel %vm66, %v65, %v63
  %71 = vrot.lane.b32.xlu0 %v14, 95
  %v72 = vpop.permute.xlu0 %71
  %73 = vrot.lane.b32.xlu0 %v16, 95
  %v74 = vpop.permute.xlu0 %73
  %vm75 = vcmask 777216
  %v76 = vsel %vm75, %v72, %v74
  %v79 = vsel %vm75, %v74, %v72
  %80 = vrot.lane.b32.xlu0 %v14, 94
  %v81 = vpop.permute.xlu0 %80
  %82 = vrot.lane.b32.xlu0 %v16, 94
  %v83 = vpop.permute.xlu0 %82
  %vm84 = vcmask 769024
  %v85 = vsel %vm84, %v81, %v83
  %v88 = vsel %vm84, %v83, %v81
  %v91 = vrot.slane %v22, 5
  %v92 = vrot.slane %v25, 5
  %v96 = vrot.slane %v31, 2
  %v97 = vrot.slane %v34, 2
  %v101 = vrot.slane %v40, 7
  %v102 = vrot.slane %v43, 7
  %v106 = vrot.slane %v49, 4
  %v107 = vrot.slane %v52, 4
  %v111 = vrot.slane %v58, 1
  %v112 = vrot.slane %v61, 1
  %v116 = vrot.slane %v67, 6
  %v117 = vrot.slane %v70, 6
  %v121 = vrot.slane %v76, 3
  %v122 = vrot.slane %v79, 3
  %vm125 = vcmask 1042432
  %v126 = vsel %vm125, %v14, %v91
  %v127 = vsel %vm125, %v16, %v92
  %vm128 = vcmask 1045504
  %v129 = vsel %vm128, %v126, %v96
  %v130 = vsel %vm128, %v127, %v97
  %vm131 = vcmask 1040384
  %v132 = vsel %vm131, %v96, %v101
  %v133 = vsel %vm131, %v97, %v102
  %vm134 = vcmask 1043456
  %v135 = vsel %vm134, %v132, %v106
  %v136 = vsel %vm134, %v133, %v107
  %vm137 = vcmask 1046528
  %v138 = vsel %vm137, %v135, %v111
  %v139 = vsel %vm137, %v136, %v112
  %vm140 = vcmask 1041408
  %v141 = vsel %vm140, %v111, %v116
  %v142 = vsel %vm140, %v112, %v117
  %vm143 = vcmask 1044480
  %v144 = vsel %vm143, %v141, %v121
  %v145 = vsel %vm143, %v142, %v122
  %v146 = vld [vmem:[%s1] sm:$0xff]
  %v147 = vld [vmem:[%s2] sm:$0xff]
  %149 = vset.pattern.permute.xlu0 0
  %150 = vperm.xlu0 %149, %v147
  %v151 = vpop.permute.xlu0 %150
  %vm153 = vcmask 220160
  %v155 = vsel %vm153, %v146, 0
  %v157 = vsel %vm125, %v85, 0
  %v160 = vsel %vm125, %v88, 0
  %162 = vmatprep.subr.mxu0 0.0
  %163 = vmatpush1.msra.mxu0 0.0
  %164 = vmatprep.subr.mxu0 0.0
  %165 = vmatpush1.msra.mxu0 0.0
  %166 = vmatprep.subr.mxu0 0.0
  %167 = vmatpush1.msra.mxu0 0.0
  %168 = vmatprep.subr.mxu0 0.0
  %169 = vmatpush1.msra.mxu0 0.0
  %170 = vmatprep.subr.mxu0 0.0
  %171 = vmatpush1.msra.mxu0 0.0
  %172 = vmatprep.subr.mxu0 0.0
  %173 = vmatpush1.msra.mxu0 0.0
  %174 = vmatprep.subr.mxu0 0.0
  %175 = vmatpush1.msra.mxu0 0.0
  %176 = vmatprep.subr.mxu0 0.0
  %177 = vmatpush1.msra.mxu0 0.0
  %178 = vmatprep.subr.mxu0 0.0
  %179 = vmatpush1.msra.mxu0 0.0
  %180 = vmatprep.subr.mxu0 0.0
  %181 = vmatpush1.msra.mxu0 0.0
  %182 = vmatprep.subr.mxu0 0.0
  %183 = vmatpush1.msra.mxu0 0.0
  %184 = vmatprep.subr.mxu0 0.0
  %185 = vmatpush1.msra.mxu0 0.0
  %186 = vmatprep.subr.mxu0 %v160
  %187 = vmatpush1.msra.mxu0 %v157
  %188 = vmatprep.subr.mxu0 %v145
  %189 = vmatpush1.msra.mxu0 %v144
  %190 = vmatprep.subr.mxu0 %v139
  %191 = vmatpush1.msra.mxu0 %v138
  %192 = vmatprep.subr.mxu0 %v130
  %193 = vmatpush1.msra.mxu0 %v129
  %194 = vmatprep.subr.mxu0 0.0
  %195 = vmatpush2.msra.mxu0 0.0
  %196 = vmatprep.subr.mxu0 0.0
  %197 = vmatpush2.msra.mxu0 0.0
  %198 = vmatprep.subr.mxu0 0.0
  %199 = vmatpush2.msra.mxu0 0.0
  %200 = vmatprep.subr.mxu0 0.0
  %201 = vmatpush2.msra.mxu0 0.0
  %202 = vmatprep.subr.mxu0 0.0
  %203 = vmatpush2.msra.mxu0 0.0
  %204 = vmatprep.subr.mxu0 0.0
  %205 = vmatpush2.msra.mxu0 0.0
  %206 = vmatprep.subr.mxu0 0.0
  %207 = vmatpush2.msra.mxu0 0.0
  %208 = vmatprep.subr.mxu0 0.0
  %209 = vmatpush2.msra.mxu0 0.0
  %210 = vmatprep.subr.mxu0 0.0
  %211 = vmatpush2.msra.mxu0 0.0
  %212 = vmatprep.subr.mxu0 0.0
  %213 = vmatpush2.msra.mxu0 0.0
  %214 = vmatprep.subr.mxu0 0.0
  %215 = vmatpush2.msra.mxu0 0.0
  %216 = vmatprep.subr.mxu0 0.0
  %217 = vmatpush2.msra.mxu0 0.0
  %218 = vmatprep.subr.mxu0 0.0
  %219 = vmatpush2.msra.mxu0 0.0
  %220 = vmatprep.subr.mxu0 0.0
  %221 = vmatpush2.msra.mxu0 0.0
  %222 = vmatprep.subr.mxu0 0.0
  %223 = vmatpush2.msra.mxu0 0.0
  %224 = vmatprep.subr.mxu0 0.0
  %225 = vmatpush2.msra.mxu0 0.0
  %226 = vmatprep.mubr.f32.mxu0 0.0
  %227 = vmatmul.mubr.f32.gmra.mxu0 %v155
  %v228 = vpop.f32.mrf.mxu0
  %v229 = vadd.f32 %v151, %v228
  %v230 = vpop.f32.mrf.mxu0
  %v231 = vadd.f32 %v151, %v230
  %232 = vdwg.mxu0
  %233 = vst [vmem:[%s3] sm:$0xff] %v229
  %234 = vst [vmem:[%s3 + $0x8] sm:$0xff] %v231
  %s235 = scalar_lea.vmem %s0, 8
  %v236 = vld [vmem:[%s235] sm:$0x77]
  %v238 = vcombine.high %v236, %v236
  %239 = vrot.lane.b32.xlu0 %v236, 127
  %v240 = vpop.permute.xlu0 %239
  %241 = vrot.lane.b32.xlu0 %v238, 127
  %v242 = vpop.permute.xlu0 %241
  %v243 = vsel %vm21, %v240, %v242
  %v246 = vsel %vm21, %v242, %v240
  %247 = vrot.lane.b32.xlu0 %v236, 126
  %v248 = vpop.permute.xlu0 %247
  %249 = vrot.lane.b32.xlu0 %v238, 126
  %v250 = vpop.permute.xlu0 %249
  %v251 = vsel %vm30, %v248, %v250
  %v254 = vsel %vm30, %v250, %v248
  %255 = vrot.lane.b32.xlu0 %v236, 112
  %v256 = vpop.permute.xlu0 %255
  %257 = vrot.lane.b32.xlu0 %v238, 112
  %v258 = vpop.permute.xlu0 %257
  %v259 = vsel %vm39, %v256, %v258
  %v262 = vsel %vm39, %v258, %v256
  %263 = vrot.lane.b32.xlu0 %v236, 111
  %v264 = vpop.permute.xlu0 %263
  %265 = vrot.lane.b32.xlu0 %v238, 111
  %v266 = vpop.permute.xlu0 %265
  %v267 = vsel %vm48, %v264, %v266
  %v270 = vsel %vm48, %v266, %v264
  %271 = vrot.lane.b32.xlu0 %v236, 110
  %v272 = vpop.permute.xlu0 %271
  %273 = vrot.lane.b32.xlu0 %v238, 110
  %v274 = vpop.permute.xlu0 %273
  %v275 = vsel %vm57, %v272, %v274
  %v278 = vsel %vm57, %v274, %v272
  %279 = vrot.lane.b32.xlu0 %v236, 96
  %v280 = vpop.permute.xlu0 %279
  %281 = vrot.lane.b32.xlu0 %v238, 96
  %v282 = vpop.permute.xlu0 %281
  %v283 = vsel %vm66, %v280, %v282
  %v286 = vsel %vm66, %v282, %v280
  %287 = vrot.lane.b32.xlu0 %v236, 95
  %v288 = vpop.permute.xlu0 %287
  %289 = vrot.lane.b32.xlu0 %v238, 95
  %v290 = vpop.permute.xlu0 %289
  %v291 = vsel %vm75, %v288, %v290
  %v294 = vsel %vm75, %v290, %v288
  %295 = vrot.lane.b32.xlu0 %v236, 94
  %v296 = vpop.permute.xlu0 %295
  %297 = vrot.lane.b32.xlu0 %v238, 94
  %v298 = vpop.permute.xlu0 %297
  %v299 = vsel %vm84, %v296, %v298
  %v302 = vsel %vm84, %v298, %v296
  %v305 = vrot.slane %v243, 5
  %v306 = vrot.slane %v246, 5
  %v310 = vrot.slane %v251, 2
  %v311 = vrot.slane %v254, 2
  %v315 = vrot.slane %v259, 7
  %v316 = vrot.slane %v262, 7
  %v320 = vrot.slane %v267, 4
  %v321 = vrot.slane %v270, 4
  %v325 = vrot.slane %v275, 1
  %v326 = vrot.slane %v278, 1
  %v330 = vrot.slane %v283, 6
  %v331 = vrot.slane %v286, 6
  %v335 = vrot.slane %v291, 3
  %v336 = vrot.slane %v294, 3
  %v339 = vsel %vm125, %v236, %v305
  %v340 = vsel %vm125, %v238, %v306
  %v341 = vsel %vm128, %v339, %v310
  %v342 = vsel %vm128, %v340, %v311
  %v343 = vsel %vm131, %v310, %v315
  %v344 = vsel %vm131, %v311, %v316
  %v345 = vsel %vm134, %v343, %v320
  %v346 = vsel %vm134, %v344, %v321
  %v347 = vsel %vm137, %v345, %v325
  %v348 = vsel %vm137, %v346, %v326
  %v349 = vsel %vm140, %v325, %v330
  %v350 = vsel %vm140, %v326, %v331
  %v351 = vsel %vm143, %v349, %v335
  %v352 = vsel %vm143, %v350, %v336
  %v353 = vld [vmem:[%s1] sm:$0xff]
  %v354 = vld [vmem:[%s2] sm:$0xff]
  %356 = vset.pattern.permute.xlu0 0
  %357 = vperm.xlu0 %356, %v354
  %v358 = vpop.permute.xlu0 %357
  %v361 = vsel %vm153, %v353, 0
  %v363 = vsel %vm125, %v299, 0
  %v366 = vsel %vm125, %v302, 0
  %368 = vmatprep.subr.mxu0 0.0
  %369 = vmatpush1.msra.mxu0 0.0
  %370 = vmatprep.subr.mxu0 0.0
  %371 = vmatpush1.msra.mxu0 0.0
  %372 = vmatprep.subr.mxu0 0.0
  %373 = vmatpush1.msra.mxu0 0.0
  %374 = vmatprep.subr.mxu0 0.0
  %375 = vmatpush1.msra.mxu0 0.0
  %376 = vmatprep.subr.mxu0 0.0
  %377 = vmatpush1.msra.mxu0 0.0
  %378 = vmatprep.subr.mxu0 0.0
  %379 = vmatpush1.msra.mxu0 0.0
  %380 = vmatprep.subr.mxu0 0.0
  %381 = vmatpush1.msra.mxu0 0.0
  %382 = vmatprep.subr.mxu0 0.0
  %383 = vmatpush1.msra.mxu0 0.0
  %384 = vmatprep.subr.mxu0 0.0
  %385 = vmatpush1.msra.mxu0 0.0
  %386 = vmatprep.subr.mxu0 0.0
  %387 = vmatpush1.msra.mxu0 0.0
  %388 = vmatprep.subr.mxu0 0.0
  %389 = vmatpush1.msra.mxu0 0.0
  %390 = vmatprep.subr.mxu0 0.0
  %391 = vmatpush1.msra.mxu0 0.0
  %392 = vmatprep.subr.mxu0 %v366
  %393 = vmatpush1.msra.mxu0 %v363
  %394 = vmatprep.subr.mxu0 %v352
  %395 = vmatpush1.msra.mxu0 %v351
  %396 = vmatprep.subr.mxu0 %v348
  %397 = vmatpush1.msra.mxu0 %v347
  %398 = vmatprep.subr.mxu0 %v342
  %399 = vmatpush1.msra.mxu0 %v341
  %400 = vmatprep.subr.mxu0 0.0
  %401 = vmatpush2.msra.mxu0 0.0
  %402 = vmatprep.subr.mxu0 0.0
  %403 = vmatpush2.msra.mxu0 0.0
  %404 = vmatprep.subr.mxu0 0.0
  %405 = vmatpush2.msra.mxu0 0.0
  %406 = vmatprep.subr.mxu0 0.0
  %407 = vmatpush2.msra.mxu0 0.0
  %408 = vmatprep.subr.mxu0 0.0
  %409 = vmatpush2.msra.mxu0 0.0
  %410 = vmatprep.subr.mxu0 0.0
  %411 = vmatpush2.msra.mxu0 0.0
  %412 = vmatprep.subr.mxu0 0.0
  %413 = vmatpush2.msra.mxu0 0.0
  %414 = vmatprep.subr.mxu0 0.0
  %415 = vmatpush2.msra.mxu0 0.0
  %416 = vmatprep.subr.mxu0 0.0
  %417 = vmatpush2.msra.mxu0 0.0
  %418 = vmatprep.subr.mxu0 0.0
  %419 = vmatpush2.msra.mxu0 0.0
  %420 = vmatprep.subr.mxu0 0.0
  %421 = vmatpush2.msra.mxu0 0.0
  %422 = vmatprep.subr.mxu0 0.0
  %423 = vmatpush2.msra.mxu0 0.0
  %424 = vmatprep.subr.mxu0 0.0
  %425 = vmatpush2.msra.mxu0 0.0
  %426 = vmatprep.subr.mxu0 0.0
  %427 = vmatpush2.msra.mxu0 0.0
  %428 = vmatprep.subr.mxu0 0.0
  %429 = vmatpush2.msra.mxu0 0.0
  %430 = vmatprep.subr.mxu0 0.0
  %431 = vmatpush2.msra.mxu0 0.0
  %432 = vmatprep.mubr.f32.mxu0 0.0
  %433 = vmatmul.mubr.f32.gmra.mxu0 %v361
  %v434 = vpop.f32.mrf.mxu0
  %v435 = vadd.f32 %v358, %v434
  %v436 = vpop.f32.mrf.mxu0
  %v437 = vadd.f32 %v358, %v436
  %438 = vdwg.mxu0
  %s439 = scalar_lea.vmem %s3, 16
  %440 = vst [vmem:[%s439] sm:$0xff] %v435
  %441 = vst [vmem:[%s439 + $0x8] sm:$0xff] %v437
  // Predicated region
  $region14: #{conv2d_net_forward.1} parent=0 // pred_check
    _
  $region15: #{conv2d_net_forward.1} parent=0 // pred_check_branch
    %443 = sbr.rel (0) target = $region17
  $region16: #{conv2d_net_forward.1} parent=0 // pred_region
    _
  $region17: #{conv2d_net_forward.1} parent=0 // pred_fallthru
    _
  // Predicated region
  $region18: #{conv2d_net_forward.1} parent=0 // pred_check
    _
  $region19: #{conv2d_net_forward.1} parent=0 // pred_check_branch
    %445 = sbr.rel (0) target = $region21
  $region20: #{conv2d_net_forward.1} parent=0 // pred_region
    _
  $region21: #{conv2d_net_forward.1} parent=0 // pred_fallthru
    _

</llo_original>
